<compile_context>
chip_gen: v5e
topology: v5e:2x2
jax: 0.10.0
libtpu: 0.0.40
codegen_flags: <defaults>
</compile_context>

<pallas_src>
import jax
import jax.numpy as jnp
from jax.experimental import pallas as pl
from jax.experimental.pallas import tpu as pltpu


_LANE = 128
_TARGET_TM = 512                 # rows per M tile (mem-bound sweet spot)
_MAX_IN_BLOCK_BYTES = 4 << 20    # keep the (R, tm, L) input block <= 4 MiB


def _round_up(x, m):
    return ((x + m - 1) // m) * m


def _sublane(dtype):
    # rows per sublane pack: f32 -> 8, bf16 -> 16, int8/fp8 -> 32
    return 32 // jnp.dtype(dtype).itemsize


def _pick_layout(total, sublane):
    """Pick a lane-dense (M, L) layout (+pad elems) for `total` flat elements."""
    for L in (1024, 512, 256, _LANE):
        if total % L == 0 and (total // L) % sublane == 0:
            return total // L, L, 0
    L = _LANE
    M = _round_up(-(-total // L), sublane)
    return M, L, M * L - total


def _pick_rep_block(rep):
    for R in (4, 2):
        if rep % R == 0:
            return R
    return 1


def _pick_tm(M, sublane, L, esize, R):
    """Largest tm that divides M, is a multiple of `sublane`, keeps the input
    block under the VMEM budget, and (when possible) leaves >= 2 M tiles for
    the 'parallel' axis (v7x has 2 TensorCores)."""
    max_tm = min(_TARGET_TM, _MAX_IN_BLOCK_BYTES // (R * L * esize))
    if M >= 2 * sublane:
        max_tm = min(max_tm, M // 2)   # guarantee >= 2 parallel tiles
    max_tm = max((max_tm // sublane) * sublane, sublane)
    for tm in range(max_tm, sublane - 1, -sublane):
        if M % tm == 0:
            return tm
    return sublane


# ---------------------------------------------------------------------------
# Kernel: accumulate rep blocks into the resident f32 output block.
# ---------------------------------------------------------------------------

def _make_mean_kernel(nb, inv_rep, rep_block):
    """nb = number of rep grid steps, inv_rep = 1/rep (both Python-static)."""

    def kernel(x_ref, o_ref):
        if rep_block == 1:
            part = x_ref[...].astype(jnp.float32)                      # (tm, L)
        else:
            part = jnp.sum(x_ref[...].astype(jnp.float32), axis=0)     # (tm, L)

        if nb == 1:
            o_ref[...] = part * inv_rep
        else:
            r = pl.program_id(1)

            @pl.when(r == 0)
            def _():
                o_ref[...] = part

            @pl.when(jnp.logical_and(r > 0, r < nb - 1))
            def _():
                o_ref[...] += part

            @pl.when(r == nb - 1)
            def _():
                o_ref[...] = (o_ref[...] + part) * inv_rep

    return kernel


# ---------------------------------------------------------------------------
# Wrappers
# ---------------------------------------------------------------------------

def mean_over_rep_stacked(rep_x):
    """(rep, M, L) float (any width) -> (M, L) float32 mean over axis 0."""
    rep, M, L = rep_x.shape
    assert L % _LANE == 0, "last dim must be a multiple of 128"
    esize = jnp.dtype(rep_x.dtype).itemsize
    sublane = _sublane(rep_x.dtype)

    M_pad = _round_up(M, sublane)
    if M_pad != M:
        # TODO(synk): rare fallback (whole-stack pad); choose layouts upstream
        # so that M is a multiple of the dtype's sublane pack.
        rep_x = jnp.pad(rep_x, ((0, 0), (0, M_pad - M), (0, 0)))

    R = _pick_rep_block(rep)
    tm = _pick_tm(M_pad, sublane, L, esize, R)
    nb = rep // R
    inv_rep = 1.0 / rep

    if R == 1:
        in_spec = pl.BlockSpec((None, tm, L), lambda i, r: (r, i, 0))
    else:
        in_spec = pl.BlockSpec((R, tm, L), lambda i, r: (r, i, 0))

    out = pl.pallas_call(
        _make_mean_kernel(nb, inv_rep, R),
        out_shape=jax.ShapeDtypeStruct((M_pad, L), jnp.float32),
        grid_spec=pltpu.PrefetchScalarGridSpec(
            num_scalar_prefetch=0,
            grid=(M_pad // tm, nb),
            in_specs=[in_spec],
            out_specs=pl.BlockSpec((tm, L), lambda i, r: (i, 0)),
        ),
        compiler_params=pltpu.CompilerParams(
            # M tiles parallel (v7x 2 TCs); rep is the reduction -> arbitrary.
            dimension_semantics=("parallel", "arbitrary"),
        ),
    )(rep_x)
    return out[:M] if M_pad != M else out


def adp_wraper_forward(x_adv, rep=1, purify_fn=None):
    """JAX/Pallas equivalent of adp_wraper.forward.

    x_adv: (B, C, H, W).  purify_fn maps (rep*B, C, H, W) -> purified images
    in its native dtype.  With the identity-purification placeholder
    (purify_fn=None) the mean over `rep` identical copies is just the input,
    so we short-circuit (bit-exact, zero HBM traffic).
    """
    B, C, H, W = x_adv.shape
    if purify_fn is None:
        # TODO(synk): plug in the real diffusion-based purification
        # (eval(config.purification.purify_method), max_iter steps,
        #  gaussian rand_type); identity placeholder short-circuits the mean.
        return x_adv

    rep_x = jnp.tile(x_adv, (rep, 1, 1, 1))        # torch: x_adv.repeat([rep,1,1,1])
    purified = purify_fn(rep_x)                     # (rep*B, C, H, W), native dtype

    per_rep = B * C * H * W
    sublane = _sublane(purified.dtype)
    M, L, pad = _pick_layout(per_rep, sublane)

    flat = purified.reshape(rep, per_rep)
    if pad:
        flat = jnp.pad(flat, ((0, 0), (0, pad)))
    mean_flat = mean_over_rep_stacked(flat.reshape(rep, M, L))   # (M, L) f32

    out = mean_flat.reshape(-1)[:per_rep].reshape(B, C, H, W)
    return out.astype(x_adv.dtype)


if __name__ == "__main__":
    key = jax.random.PRNGKey(0)
    B, C, H, W = 2, 4, 16, 16
    rep = 4

    x_adv = jax.random.uniform(key, (B, C, H, W), dtype=jnp.float32)

    # 1) identity-purify path: short-circuited, bit-exact.
    out_id = jax.block_until_ready(adp_wraper_forward(x_adv, rep=rep))
    assert out_id.shape == (B, C, H, W)
    assert jnp.array_equal(out_id, x_adv), "identity path mismatch"

    # 2) full forward with a stand-in non-identity bf16 purifier (stacked kernel path).
    nkey = jax.random.PRNGKey(1)

    def fake_purify(x):
        noise = 0.05 * jax.random.normal(nkey, x.shape, jnp.float32)
        return (x.astype(jnp.float32) + noise).astype(jnp.bfloat16)

    out = jax.block_until_ready(adp_wraper_forward(x_adv, rep=rep, purify_fn=fake_purify))
    pur = fake_purify(jnp.tile(x_adv, (rep, 1, 1, 1)))
    ref = pur.astype(jnp.float32).reshape(rep, B, C, H, W).mean(0).astype(x_adv.dtype)
    assert out.shape == (B, C, H, W)
    assert jnp.allclose(out, ref, atol=1e-5, rtol=1e-5), "forward (bf16 purifier) mismatch"

    # 3) direct kernel checks: f32 / R==1 (squeezed, multi-step) and bf16 / R==4 paths.
    s1 = jax.random.normal(jax.random.PRNGKey(2), (3, 64, 256), jnp.float32)
    o1 = jax.block_until_ready(mean_over_rep_stacked(s1))
    assert jnp.allclose(o1, s1.mean(0), atol=1e-5, rtol=1e-5), "f32 stacked mismatch"

    s2 = jax.random.normal(jax.random.PRNGKey(3), (8, 128, 256), jnp.float32).astype(jnp.bfloat16)
    o2 = jax.block_until_ready(mean_over_rep_stacked(s2))
    assert jnp.allclose(o2, s2.astype(jnp.float32).mean(0), atol=1e-5, rtol=1e-5), \
        "bf16 stacked mismatch"

    print("KERNEL_OK")
</pallas_src>

<mosaic_0001>
module attributes {stable_mosaic.version = 11 : i64} {
  func.func @kernel(%arg0: i32, %arg1: i32, %arg2: memref<4x16x128xbf16, #tpu.memory_space<vmem>>, %arg3: memref<16x128xf32, #tpu.memory_space<vmem>>) attributes {dimension_semantics = [#tpu.dimension_semantics<parallel>, #tpu.dimension_semantics<arbitrary>], iteration_bounds = array<i64: 1, 1>, scalar_prefetch = 0 : i64, scratch_operands = 0 : i64, tpu.core_type = #tpu.core_type<tc>, window_params = [{transform_indices = @transform_0, window_bounds = array<i64: 4, 16, 128>}, {transform_indices = @transform_1, window_bounds = array<i64: 16, 128>}]} {
    %c0 = arith.constant 0 : index
    %c0_0 = arith.constant 0 : index
    %c0_1 = arith.constant 0 : index
    %0 = vector.load %arg2[%c0, %c0_0, %c0_1] : memref<4x16x128xbf16, #tpu.memory_space<vmem>>, vector<4x16x128xbf16>
    %1 = arith.extf %0 : vector<4x16x128xbf16> to vector<4x16x128xf32>
    %cst = arith.constant dense<0.000000e+00> : vector<16x128xf32>
    %2 = vector.multi_reduction <add>, %1, %cst [0] : vector<4x16x128xf32> to vector<16x128xf32>
    %cst_2 = arith.constant 2.500000e-01 : f32
    %3 = vector.broadcast %cst_2 : f32 to vector<16x128xf32>
    %4 = arith.mulf %2, %3 : vector<16x128xf32>
    %c0_3 = arith.constant 0 : index
    %c0_4 = arith.constant 0 : index
    %5 = vector.load %arg3[%c0_3, %c0_4] : memref<16x128xf32, #tpu.memory_space<vmem>>, vector<16x128xf32>
    tpu.vector_store %arg3[%c0_3, %c0_4], %4 {strides = array<i32>} : memref<16x128xf32, #tpu.memory_space<vmem>>, vector<16x128xf32>,
    return
  }
  func.func @transform_0(%arg0: i32, %arg1: i32) -> (i32, i32, i32) {
    %c0_i32 = arith.constant 0 : i32
    %c0_i32_0 = arith.constant 0 : i32
    return %arg1, %arg0, %c0_i32 : i32, i32, i32
  }
  func.func @transform_1(%arg0: i32, %arg1: i32) -> (i32, i32) {
    %c0_i32 = arith.constant 0 : i32
    %c0_i32_0 = arith.constant 0 : i32
    return %arg0, %c0_i32 : i32, i32
  }
}

</mosaic_0001>

<llo_original>
// kernel: tpu_custom_call.1
$region0: #{tpu_custom_call.1}
  #allocation0 [shape = 'u32[]', space=smem, size = 0x4, offset = 0x4, fixed_abs, tag = 'smem constant byte address 0x4 - core index']
  #allocation1 [shape = 'u32[72,128]{1,0:T(1,128)}', space=vmem, size = 0x9000, scoped, tag = 'internal scratch']
  %s0 = inlined_call_operand.hbm [shape: bf16[4,16,128], index: 0, kind: input, shape index: {}]
  %s1 = inlined_call_operand.hbm [shape: f32[16,128], index: 1, kind: output, shape index: {}]
  %s2 = sld [smem:[#allocation0]]
  $region18: #{tpu_custom_call.1} parent=0
    _
  %s4 = ssub.s32 1, %s2
  %s5 = scalar_select 0, %s4, %s2
  $region1: #{tpu_custom_call.1} parent=0
    #allocation2 [shape = 'u8[16384]{0}', space=vmem, size = 0x4000, scoped, tag = 'input window, operand 0, single buffered']
    #allocation3 [shape = 's32[1]{0}', space=sflag, size = 0x4, scoped, tag = 'scoped memory for tpu_custom_call.1']
    #allocation4 [shape = 's32[1]{0}', space=sflag, size = 0x4, scoped, tag = 'scoped memory for tpu_custom_call.1']
    #allocation5 [shape = 'u8[8192]{0}', space=vmem, size = 0x2000, scoped, tag = 'output window, operand 0, single buffered']
    %6 = vsyncpa [#allocation3], 0
    %7 = vsyncpa [#allocation4], 0
    // Predicated region
    $region2: #{tpu_custom_call.1} parent=1 // pred_check
      _
    $region3: #{tpu_custom_call.1} parent=1 // pred_check_branch
      %9 = sbr.rel (0) target = $region5
    $region4: #{tpu_custom_call.1} parent=1 // pred_region
      %11 = vsyncadd [#allocation3], 0
      %s12 = sshll.u32 %s0, 4
      %s13 = int_to_ptr.hbm [resolvable:$true] %s12
      %s14 = sshll.u32 [#allocation2], 4
      %s15 = int_to_ptr.vmem [resolvable:$true] %s14
      %20 = dma.hbm_to_vmem [thread:$0]  %s13, 512, %s15, [#allocation3], 64, 64, 4
    $region5: #{tpu_custom_call.1} parent=1 // pred_fallthru
      _
    // Predicated region
    $region6: #{tpu_custom_call.1} parent=1 // pred_check
      _
    $region7: #{tpu_custom_call.1} parent=1 // pred_check_branch
      %22 = sbr.rel (0) target = $region9
    $region8: #{tpu_custom_call.1} parent=1 // pred_region
      %24 = dma.done [#allocation3], 512
    $region9: #{tpu_custom_call.1} parent=1 // pred_fallthru
      _
    %v25 = vld [vmem:[#allocation2] sm:$0xf]
    %v26 = vld [vmem:[#allocation2 + $0x4] sm:$0xf]
    %v27 = vld [vmem:[#allocation2 + $0x8] sm:$0xf]
    %v28 = vld [vmem:[#allocation2 + $0xc] sm:$0xf]
    %v29 = vld [vmem:[#allocation2 + $0x10] sm:$0xf]
    %v30 = vld [vmem:[#allocation2 + $0x14] sm:$0xf]
    %v31 = vld [vmem:[#allocation2 + $0x18] sm:$0xf]
    %v32 = vld [vmem:[#allocation2 + $0x1c] sm:$0xf]
    %v33 = vunpack.c.l.bf16 %v25
    %v34 = vunpack.c.l.bf16 %v26
    %v35 = vunpack.c.l.bf16 %v27
    %v36 = vunpack.c.l.bf16 %v28
    %v37 = vunpack.c.l.bf16 %v29
    %v38 = vunpack.c.l.bf16 %v30
    %v39 = vunpack.c.l.bf16 %v31
    %v40 = vunpack.c.l.bf16 %v32
    %v41 = vadd.f32 %v33, %v35
    %v42 = vadd.f32 %v41, %v37
    %v43 = vadd.f32 %v42, %v39
    %v44 = vadd.f32 %v34, %v36
    %v45 = vadd.f32 %v44, %v38
    %v46 = vadd.f32 %v45, %v40
    %v47 = vmul.f32 %v43, 0.25
    %v48 = vmul.f32 %v46, 0.25
    %49 = vst [vmem:[#allocation5] sm:$0xff] %v47
    %50 = vst [vmem:[#allocation5 + $0x8] sm:$0xff] %v48
    // Predicated region
    $region10: #{tpu_custom_call.1} parent=1 // pred_check
      _
    $region11: #{tpu_custom_call.1} parent=1 // pred_check_branch
      %52 = sbr.rel (0) target = $region13
    $region12: #{tpu_custom_call.1} parent=1 // pred_region
      %54 = vsyncadd [#allocation4], 0
      %s55 = sshll.u32 [#allocation5], 4
      %s56 = int_to_ptr.vmem [resolvable:$true] %s55
      %s57 = sshll.u32 %s1, 4
      %s58 = int_to_ptr.hbm [resolvable:$true] %s57
      %63 = dma.vmem_to_hbm [thread:$0]  %s56, 256, %s58, [#allocation4], 128, 128, 8
    $region13: #{tpu_custom_call.1} parent=1 // pred_fallthru
      _
    // Predicated region
    $region14: #{tpu_custom_call.1} parent=1 // pred_check
      _
    $region15: #{tpu_custom_call.1} parent=1 // pred_check_branch
      %65 = sbr.rel (0) target = $region17
    $region16: #{tpu_custom_call.1} parent=1 // pred_region
      %67 = dma.done [#allocation4], 256
    $region17: #{tpu_custom_call.1} parent=1 // pred_fallthru
      _
    %68 = vsyncpa [#allocation3], 1
    %69 = vsyncpa [#allocation4], 1

</llo_original>
